<compile_context>
chip_gen: v7x
topology: tpu7x:2x2x1
jax: 0.10.0
libtpu: 0.0.40
codegen_flags: <defaults>
</compile_context>

<pallas_src>
import functools

import jax
import jax.numpy as jnp
import numpy as np
from jax.experimental import pallas as pl
from jax.experimental.pallas import tpu as pltpu


def _round_up(a: int, b: int) -> int:
    return (a + b - 1) // b * b


def _cdiv(a: int, b: int) -> int:
    return (a + b - 1) // b


def _pick_chunk_j(emb: int, target_cols: int) -> int:
    """j-values per fused chunk: largest power of two that divides E and keeps the
    chunk width jc*E at or under ~target_cols lanes (so the halving tree is exact
    and there are no remainder chunks). Works for any E (jc may be 1)."""
    jc = 1
    while (jc * 2 <= emb and emb % (jc * 2) == 0 and jc * 2 * emb <= target_cols):
        jc *= 2
    return jc


def _choose_row_tiling(m: int, tile_m: int):
    """Balanced row tiles (M=260 no longer pads to 512); force >=2 tiles once M is
    large enough that splitting across v7x's two TensorCores is worthwhile."""
    n_tiles = max(1, _cdiv(m, tile_m))
    if m >= 128:                       # each core gets >= 64 rows -> worth splitting
        n_tiles = max(n_tiles, 2)
    tm = _round_up(_cdiv(m, n_tiles), 8)
    m_pad = _round_up(m, tm)
    return tm, m_pad


def _bilinear_kernel(x_ref, w_ref, t_ref, b_ref, o_ref, *, num_layers, emb, jc):
    """One tile of rows.

    x_ref : (tm, E)        fp32  input rows (x0)
    w_ref : (E, L*E*E)     bf16  W_all[i, l*E*E + j*E + o] = W_l[o, i, j]
    t_ref : (E, E*E)       bf16  T_rep[j', j*E + o] = (j' == j)  (0/1 repeat matrix)
    b_ref : (L, 1, E)      fp32  per-layer bias
    o_ref : (tm, E)        fp32  output rows
    """
    ee = emb * emb
    ch = jc * emb                      # fused chunk width in lanes
    n_chunks = emb // jc

    x0 = x_ref[...].astype(jnp.float32)            # (tm, E)
    x0_bf = x0.astype(jnp.bfloat16)

    x = x0
    for l in range(num_layers):                    # static unroll: L is small
        # Layer 0's running x is x0 -> reuse x0_bf (no recast). (Full fold of
        # T_rep's columns into W_all to merge the two layer-0 dots was judged a
        # few-percent win and skipped for simplicity.)
        x_bf = x0_bf if l == 0 else x.astype(jnp.bfloat16)

        acc = x0 + b_ref[l]                        # residual + bias, fp32 (tm, E)

        for c in range(n_chunks):                  # static: n_chunks = E // jc
            lo = c * ch                            # chunk start (multiple of ch)
            w_chunk = w_ref[:, l * ee + lo: l * ee + lo + ch]      # (E, ch) bf16
            t_chunk = t_ref[:, lo: lo + ch]                        # (E, ch) bf16

            # z[m, (j-c*jc)*E + o] = sum_i x0[m,i] * W_l[o,i,j]
            z = jnp.dot(x0_bf, w_chunk, preferred_element_type=jnp.float32)
            # r[m, (j-c*jc)*E + o] = x[m, j]   (exact lane-dense repeat via 0/1 matmul)
            r = jnp.dot(x_bf, t_chunk, preferred_element_type=jnp.float32)

            p = z * r                              # (tm, ch) fp32, VPU

            # sum over the jc j-groups: halving tree of static lane slices + adds
            # (jc is a power of two; no (tm, jc, E) reshape relayout).
            width = ch
            while width > emb:
                half = width // 2
                p = p[:, :half] + p[:, half:width]
                width = half
            acc = acc + p                          # (tm, E) fp32

        x = acc

    o_ref[...] = x.astype(o_ref.dtype)


def prepare_bilinear_params(weights, biases):
    """One-time re-layout of the nn.Bilinear parameters (hoisted out of the forward).

    weights : (L, E, E, E) fp32, W_l[o, i, j]  (nn.Bilinear layout)
    biases  : (L, E)       fp32
    """
    L, E = weights.shape[0], weights.shape[1]
    # (L, O, I, J) -> (I, L, J, O) -> (I, L*J*O): column index = l*E*E + j*E + o
    w_all = jnp.transpose(weights.astype(jnp.float32), (2, 0, 3, 1))
    w_all = w_all.reshape(E, L * E * E).astype(jnp.bfloat16)
    # T_rep[j', j*E + o] = (j' == j): x @ T_rep repeats each x element E times (exact).
    t_rep = jnp.repeat(jnp.eye(E, dtype=jnp.bfloat16), E, axis=1)      # (E, E*E)
    b_all = biases.reshape(L, 1, E).astype(jnp.float32)
    return w_all, t_rep, b_all


def bilinear_network_forward(emb_inputs, w_all, t_rep, b_all, *,
                             tile_m=256, chunk_cols=512):
    """emb_inputs: (B, N, E) -> (B, N, E). Params come from prepare_bilinear_params."""
    B, N, E = emb_inputs.shape
    L = b_all.shape[0]
    ee = E * E
    M = B * N

    x = emb_inputs.reshape(M, E).astype(jnp.float32)

    # Balanced (and, for M >= 128, megacore-splittable) row tiles; pad the tail so any
    # B*N works. Padded tail rows compute finite bias-propagated garbage that is sliced
    # off below — intentional and safe.
    tm, m_pad = _choose_row_tiling(M, tile_m)
    if m_pad != M:
        x = jnp.pad(x, ((0, m_pad - M), (0, 0)))

    jc = _pick_chunk_j(E, chunk_cols)
    ch = jc * E

    kernel = functools.partial(_bilinear_kernel, num_layers=L, emb=E, jc=jc)

    flops = 4 * m_pad * E * (L * ee)          # z + r chunked matmuls
    flops += 3 * m_pad * L * ee               # elementwise multiply + tree reduce
    bytes_accessed = (2 * m_pad * E * 4       # x in / out (fp32)
                      + E * L * ee * 2        # weights (bf16)
                      + E * ee * 2            # repeat matrix (bf16)
                      + L * E * 4)            # bias

    # Explicit VMEM budget with headroom (32 MiB floor, capped at v7x's 64 MiB/TC).
    vmem_est = (4 * tm * E * 4                # x in + out tiles, double-buffered fp32
                + E * L * ee * 2              # W_all (single-buffered)
                + E * ee * 2                  # T_rep (single-buffered)
                + L * E * 4                   # bias
                + 6 * tm * ch * 4)            # fused chunk intermediates (z, r, p) + slack
    vmem_limit = int(min(max(2 * vmem_est, 32 << 20), 64 << 20))

    const2 = lambda i: (0, 0)
    out_flat = pl.pallas_call(
        kernel,
        out_shape=jax.ShapeDtypeStruct((m_pad, E), jnp.float32),
        grid_spec=pltpu.PrefetchScalarGridSpec(
            num_scalar_prefetch=0,
            grid=(m_pad // tm,),
            in_specs=[
                pl.BlockSpec((tm, E), lambda i: (i, 0)),
                # Grid-invariant operands: single pipeline buffer (they never change
                # across grid steps) -> no redundant second copy in VMEM.
                pl.BlockSpec((E, L * ee), const2, pipeline_mode=pl.Buffered(1)),
                pl.BlockSpec((E, ee), const2, pipeline_mode=pl.Buffered(1)),
                pl.BlockSpec((L, 1, E), lambda i: (0, 0, 0),
                             pipeline_mode=pl.Buffered(1)),
            ],
            out_specs=pl.BlockSpec((tm, E), lambda i: (i, 0)),
        ),
        compiler_params=pltpu.CompilerParams(
            dimension_semantics=("parallel",),     # row axis: megacore-shardable on v7x
            vmem_limit_bytes=vmem_limit,
        ),
        cost_estimate=pl.CostEstimate(
            flops=flops, transcendentals=0, bytes_accessed=bytes_accessed),
    )(x, w_all, t_rep, b_all)

    return out_flat[:M].reshape(B, N, E)


# ----------------------------- references -----------------------------------

def _reference_fp32(emb_inputs, weights, biases):
    """Exact fp32 version of the PyTorch forward."""
    x0 = emb_inputs.astype(jnp.float32)
    x = x0
    for l in range(weights.shape[0]):
        out = jnp.einsum("bni,oij,bnj->bno", x0, weights[l], x,
                         precision=jax.lax.Precision.HIGHEST) + biases[l]
        x = out + x0
    return x


def _reference_bf16_matched(emb_inputs, weights, biases):
    """Mirrors the kernel numerics: bf16 matmul operands, fp32 accumulation/residual."""
    f32, bf16 = jnp.float32, jnp.bfloat16
    x0 = emb_inputs.astype(f32)
    x0_bf = x0.astype(bf16).astype(f32)
    w_bf = weights.astype(bf16).astype(f32)
    x = x0
    for l in range(weights.shape[0]):
        x_bf = x.astype(bf16).astype(f32)
        out = jnp.einsum("bni,oij,bnj->bno", x0_bf, w_bf[l], x_bf,
                         precision=jax.lax.Precision.HIGHEST) + biases[l]
        x = out + x0
    return x


if __name__ == "__main__":
    B, N, E, L = 2, 8, 32, 2  # batch, num_fields, embed_size(=inputs_size), num_layers

    key = jax.random.PRNGKey(0)
    k_x, k_w, k_b = jax.random.split(key, 3)

    emb_inputs = jax.random.normal(k_x, (B, N, E), dtype=jnp.float32)

    # Deterministic nn.Bilinear-style init: uniform(-1/sqrt(I), 1/sqrt(I))
    bound = 1.0 / float(np.sqrt(E))
    weights = jax.random.uniform(k_w, (L, E, E, E), minval=-bound, maxval=bound,
                                 dtype=jnp.float32)
    biases = jax.random.uniform(k_b, (L, E), minval=-bound, maxval=bound,
                                dtype=jnp.float32)

    # One-time weight re-layout, hoisted out of the per-call path.
    w_all, t_rep, b_all = prepare_bilinear_params(weights, biases)

    fwd = jax.jit(functools.partial(bilinear_network_forward,
                                    tile_m=256, chunk_cols=512))
    out = jax.block_until_ready(fwd(emb_inputs, w_all, t_rep, b_all))
    assert out.shape == (B, N, E)
    out_np = np.asarray(out)

    # 1) Tight check against a reference that mirrors the kernel's bf16-matmul numerics.
    ref_matched = np.asarray(jax.block_until_ready(
        _reference_bf16_matched(emb_inputs, weights, biases)))
    np.testing.assert_allclose(out_np, ref_matched, rtol=5e-3, atol=5e-3)

    # 2) Loose, scale-relative check against the exact fp32 PyTorch-semantics reference
    #    (bf16 MXU operands cost ~1% accuracy on this chained quadratic form).
    ref_fp32 = np.asarray(jax.block_until_ready(
        _reference_fp32(emb_inputs, weights, biases)))
    scale = float(np.max(np.abs(ref_fp32)))
    max_err = float(np.max(np.abs(out_np - ref_fp32)))
    assert max_err <= 5e-2 * max(scale, 1.0), (max_err, scale)

    print("KERNEL_OK")
</pallas_src>

<mosaic_0001>
module attributes {stable_mosaic.version = 11 : i64} {
  func.func @_bilinear_kernel(%arg0: i32, %arg1: memref<16x32xf32, #tpu.memory_space<vmem>>, %arg2: memref<32x2048xbf16, #tpu.memory_space<vmem>>, %arg3: memref<32x1024xbf16, #tpu.memory_space<vmem>>, %arg4: memref<2x1x32xf32, #tpu.memory_space<vmem>>, %arg5: memref<16x32xf32, #tpu.memory_space<vmem>>) attributes {dimension_semantics = [#tpu.dimension_semantics<parallel>], iteration_bounds = array<i64: 1>, scalar_prefetch = 0 : i64, scratch_operands = 0 : i64, tpu.core_type = #tpu.core_type<tc>, window_params = [{transform_indices = @transform_0, window_bounds = array<i64: 16, 32>}, {pipeline_mode = #tpu.pipeline_mode<synchronous>, transform_indices = @transform_1, window_bounds = array<i64: 32, 2048>}, {pipeline_mode = #tpu.pipeline_mode<synchronous>, transform_indices = @transform_2, window_bounds = array<i64: 32, 1024>}, {pipeline_mode = #tpu.pipeline_mode<synchronous>, transform_indices = @transform_3, window_bounds = array<i64: 2, 1, 32>}, {transform_indices = @transform_4, window_bounds = array<i64: 16, 32>}]} {
    %c0 = arith.constant 0 : index
    %c0_0 = arith.constant 0 : index
    %0 = vector.load %arg1[%c0, %c0_0] : memref<16x32xf32, #tpu.memory_space<vmem>>, vector<16x32xf32>
    %1 = arith.truncf %0 : vector<16x32xf32> to vector<16x32xbf16>
    %c0_1 = arith.constant 0 : index
    %c0_2 = arith.constant 0 : index
    %c0_3 = arith.constant 0 : index
    %2 = vector.load %arg4[%c0_1, %c0_2, %c0_3] : memref<2x1x32xf32, #tpu.memory_space<vmem>>, vector<1x1x32xf32>
    %3 = vector.shape_cast %2 : vector<1x1x32xf32> to vector<1x32xf32>
    %4 = vector.broadcast %3 : vector<1x32xf32> to vector<16x32xf32>
    %5 = arith.addf %0, %4 : vector<16x32xf32>
    %c0_4 = arith.constant 0 : index
    %c0_5 = arith.constant 0 : index
    %6 = vector.load %arg2[%c0_4, %c0_5] : memref<32x2048xbf16, #tpu.memory_space<vmem>>, vector<32x512xbf16>
    %c0_6 = arith.constant 0 : index
    %c0_7 = arith.constant 0 : index
    %7 = vector.load %arg3[%c0_6, %c0_7] : memref<32x1024xbf16, #tpu.memory_space<vmem>>, vector<32x512xbf16>
    %cst = arith.constant dense<0.000000e+00> : vector<16x512xf32>
    %8 = tpu.matmul %1, %6, %cst {dimension_numbers = #tpu.dot_dimension_numbers<[1], [0], [0], [1], [0, 0, 1, 1], [], []>} : vector<16x32xbf16>, vector<32x512xbf16>, vector<16x512xf32> -> vector<16x512xf32>
    %cst_8 = arith.constant dense<0.000000e+00> : vector<16x512xf32>
    %9 = tpu.matmul %1, %7, %cst_8 {dimension_numbers = #tpu.dot_dimension_numbers<[1], [0], [0], [1], [0, 0, 1, 1], [], []>} : vector<16x32xbf16>, vector<32x512xbf16>, vector<16x512xf32> -> vector<16x512xf32>
    %10 = arith.mulf %8, %9 : vector<16x512xf32>
    %11 = vector.extract_strided_slice %10 {offsets = [0, 0], sizes = [16, 256], strides = [1, 1]} : vector<16x512xf32> to vector<16x256xf32>
    %12 = vector.extract_strided_slice %10 {offsets = [0, 256], sizes = [16, 256], strides = [1, 1]} : vector<16x512xf32> to vector<16x256xf32>
    %13 = arith.addf %11, %12 : vector<16x256xf32>
    %14 = vector.extract_strided_slice %13 {offsets = [0, 0], sizes = [16, 128], strides = [1, 1]} : vector<16x256xf32> to vector<16x128xf32>
    %15 = vector.extract_strided_slice %13 {offsets = [0, 128], sizes = [16, 128], strides = [1, 1]} : vector<16x256xf32> to vector<16x128xf32>
    %16 = arith.addf %14, %15 : vector<16x128xf32>
    %17 = vector.extract_strided_slice %16 {offsets = [0, 0], sizes = [16, 64], strides = [1, 1]} : vector<16x128xf32> to vector<16x64xf32>
    %18 = vector.extract_strided_slice %16 {offsets = [0, 64], sizes = [16, 64], strides = [1, 1]} : vector<16x128xf32> to vector<16x64xf32>
    %19 = arith.addf %17, %18 : vector<16x64xf32>
    %20 = vector.extract_strided_slice %19 {offsets = [0, 0], sizes = [16, 32], strides = [1, 1]} : vector<16x64xf32> to vector<16x32xf32>
    %21 = vector.extract_strided_slice %19 {offsets = [0, 32], sizes = [16, 32], strides = [1, 1]} : vector<16x64xf32> to vector<16x32xf32>
    %22 = arith.addf %20, %21 : vector<16x32xf32>
    %23 = arith.addf %5, %22 : vector<16x32xf32>
    %c0_9 = arith.constant 0 : index
    %c512 = arith.constant 512 : index
    %24 = vector.load %arg2[%c0_9, %c512] : memref<32x2048xbf16, #tpu.memory_space<vmem>>, vector<32x512xbf16>
    %c0_10 = arith.constant 0 : index
    %c512_11 = arith.constant 512 : index
    %25 = vector.load %arg3[%c0_10, %c512_11] : memref<32x1024xbf16, #tpu.memory_space<vmem>>, vector<32x512xbf16>
    %cst_12 = arith.constant dense<0.000000e+00> : vector<16x512xf32>
    %26 = tpu.matmul %1, %24, %cst_12 {dimension_numbers = #tpu.dot_dimension_numbers<[1], [0], [0], [1], [0, 0, 1, 1], [], []>} : vector<16x32xbf16>, vector<32x512xbf16>, vector<16x512xf32> -> vector<16x512xf32>
    %cst_13 = arith.constant dense<0.000000e+00> : vector<16x512xf32>
    %27 = tpu.matmul %1, %25, %cst_13 {dimension_numbers = #tpu.dot_dimension_numbers<[1], [0], [0], [1], [0, 0, 1, 1], [], []>} : vector<16x32xbf16>, vector<32x512xbf16>, vector<16x512xf32> -> vector<16x512xf32>
    %28 = arith.mulf %26, %27 : vector<16x512xf32>
    %29 = vector.extract_strided_slice %28 {offsets = [0, 0], sizes = [16, 256], strides = [1, 1]} : vector<16x512xf32> to vector<16x256xf32>
    %30 = vector.extract_strided_slice %28 {offsets = [0, 256], sizes = [16, 256], strides = [1, 1]} : vector<16x512xf32> to vector<16x256xf32>
    %31 = arith.addf %29, %30 : vector<16x256xf32>
    %32 = vector.extract_strided_slice %31 {offsets = [0, 0], sizes = [16, 128], strides = [1, 1]} : vector<16x256xf32> to vector<16x128xf32>
    %33 = vector.extract_strided_slice %31 {offsets = [0, 128], sizes = [16, 128], strides = [1, 1]} : vector<16x256xf32> to vector<16x128xf32>
    %34 = arith.addf %32, %33 : vector<16x128xf32>
    %35 = vector.extract_strided_slice %34 {offsets = [0, 0], sizes = [16, 64], strides = [1, 1]} : vector<16x128xf32> to vector<16x64xf32>
    %36 = vector.extract_strided_slice %34 {offsets = [0, 64], sizes = [16, 64], strides = [1, 1]} : vector<16x128xf32> to vector<16x64xf32>
    %37 = arith.addf %35, %36 : vector<16x64xf32>
    %38 = vector.extract_strided_slice %37 {offsets = [0, 0], sizes = [16, 32], strides = [1, 1]} : vector<16x64xf32> to vector<16x32xf32>
    %39 = vector.extract_strided_slice %37 {offsets = [0, 32], sizes = [16, 32], strides = [1, 1]} : vector<16x64xf32> to vector<16x32xf32>
    %40 = arith.addf %38, %39 : vector<16x32xf32>
    %41 = arith.addf %23, %40 : vector<16x32xf32>
    %42 = arith.truncf %41 : vector<16x32xf32> to vector<16x32xbf16>
    %c1 = arith.constant 1 : index
    %c0_14 = arith.constant 0 : index
    %c0_15 = arith.constant 0 : index
    %43 = vector.load %arg4[%c1, %c0_14, %c0_15] : memref<2x1x32xf32, #tpu.memory_space<vmem>>, vector<1x1x32xf32>
    %44 = vector.shape_cast %43 : vector<1x1x32xf32> to vector<1x32xf32>
    %45 = vector.broadcast %44 : vector<1x32xf32> to vector<16x32xf32>
    %46 = arith.addf %0, %45 : vector<16x32xf32>
    %c0_16 = arith.constant 0 : index
    %c1024 = arith.constant 1024 : index
    %47 = vector.load %arg2[%c0_16, %c1024] : memref<32x2048xbf16, #tpu.memory_space<vmem>>, vector<32x512xbf16>
    %c0_17 = arith.constant 0 : index
    %c0_18 = arith.constant 0 : index
    %48 = vector.load %arg3[%c0_17, %c0_18] : memref<32x1024xbf16, #tpu.memory_space<vmem>>, vector<32x512xbf16>
    %cst_19 = arith.constant dense<0.000000e+00> : vector<16x512xf32>
    %49 = tpu.matmul %1, %47, %cst_19 {dimension_numbers = #tpu.dot_dimension_numbers<[1], [0], [0], [1], [0, 0, 1, 1], [], []>} : vector<16x32xbf16>, vector<32x512xbf16>, vector<16x512xf32> -> vector<16x512xf32>
    %cst_20 = arith.constant dense<0.000000e+00> : vector<16x512xf32>
    %50 = tpu.matmul %42, %48, %cst_20 {dimension_numbers = #tpu.dot_dimension_numbers<[1], [0], [0], [1], [0, 0, 1, 1], [], []>} : vector<16x32xbf16>, vector<32x512xbf16>, vector<16x512xf32> -> vector<16x512xf32>
    %51 = arith.mulf %49, %50 : vector<16x512xf32>
    %52 = vector.extract_strided_slice %51 {offsets = [0, 0], sizes = [16, 256], strides = [1, 1]} : vector<16x512xf32> to vector<16x256xf32>
    %53 = vector.extract_strided_slice %51 {offsets = [0, 256], sizes = [16, 256], strides = [1, 1]} : vector<16x512xf32> to vector<16x256xf32>
    %54 = arith.addf %52, %53 : vector<16x256xf32>
    %55 = vector.extract_strided_slice %54 {offsets = [0, 0], sizes = [16, 128], strides = [1, 1]} : vector<16x256xf32> to vector<16x128xf32>
    %56 = vector.extract_strided_slice %54 {offsets = [0, 128], sizes = [16, 128], strides = [1, 1]} : vector<16x256xf32> to vector<16x128xf32>
    %57 = arith.addf %55, %56 : vector<16x128xf32>
    %58 = vector.extract_strided_slice %57 {offsets = [0, 0], sizes = [16, 64], strides = [1, 1]} : vector<16x128xf32> to vector<16x64xf32>
    %59 = vector.extract_strided_slice %57 {offsets = [0, 64], sizes = [16, 64], strides = [1, 1]} : vector<16x128xf32> to vector<16x64xf32>
    %60 = arith.addf %58, %59 : vector<16x64xf32>
    %61 = vector.extract_strided_slice %60 {offsets = [0, 0], sizes = [16, 32], strides = [1, 1]} : vector<16x64xf32> to vector<16x32xf32>
    %62 = vector.extract_strided_slice %60 {offsets = [0, 32], sizes = [16, 32], strides = [1, 1]} : vector<16x64xf32> to vector<16x32xf32>
    %63 = arith.addf %61, %62 : vector<16x32xf32>
    %64 = arith.addf %46, %63 : vector<16x32xf32>
    %c0_21 = arith.constant 0 : index
    %c1536 = arith.constant 1536 : index
    %65 = vector.load %arg2[%c0_21, %c1536] : memref<32x2048xbf16, #tpu.memory_space<vmem>>, vector<32x512xbf16>
    %c0_22 = arith.constant 0 : index
    %c512_23 = arith.constant 512 : index
    %66 = vector.load %arg3[%c0_22, %c512_23] : memref<32x1024xbf16, #tpu.memory_space<vmem>>, vector<32x512xbf16>
    %cst_24 = arith.constant dense<0.000000e+00> : vector<16x512xf32>
    %67 = tpu.matmul %1, %65, %cst_24 {dimension_numbers = #tpu.dot_dimension_numbers<[1], [0], [0], [1], [0, 0, 1, 1], [], []>} : vector<16x32xbf16>, vector<32x512xbf16>, vector<16x512xf32> -> vector<16x512xf32>
    %cst_25 = arith.constant dense<0.000000e+00> : vector<16x512xf32>
    %68 = tpu.matmul %42, %66, %cst_25 {dimension_numbers = #tpu.dot_dimension_numbers<[1], [0], [0], [1], [0, 0, 1, 1], [], []>} : vector<16x32xbf16>, vector<32x512xbf16>, vector<16x512xf32> -> vector<16x512xf32>
    %69 = arith.mulf %67, %68 : vector<16x512xf32>
    %70 = vector.extract_strided_slice %69 {offsets = [0, 0], sizes = [16, 256], strides = [1, 1]} : vector<16x512xf32> to vector<16x256xf32>
    %71 = vector.extract_strided_slice %69 {offsets = [0, 256], sizes = [16, 256], strides = [1, 1]} : vector<16x512xf32> to vector<16x256xf32>
    %72 = arith.addf %70, %71 : vector<16x256xf32>
    %73 = vector.extract_strided_slice %72 {offsets = [0, 0], sizes = [16, 128], strides = [1, 1]} : vector<16x256xf32> to vector<16x128xf32>
    %74 = vector.extract_strided_slice %72 {offsets = [0, 128], sizes = [16, 128], strides = [1, 1]} : vector<16x256xf32> to vector<16x128xf32>
    %75 = arith.addf %73, %74 : vector<16x128xf32>
    %76 = vector.extract_strided_slice %75 {offsets = [0, 0], sizes = [16, 64], strides = [1, 1]} : vector<16x128xf32> to vector<16x64xf32>
    %77 = vector.extract_strided_slice %75 {offsets = [0, 64], sizes = [16, 64], strides = [1, 1]} : vector<16x128xf32> to vector<16x64xf32>
    %78 = arith.addf %76, %77 : vector<16x64xf32>
    %79 = vector.extract_strided_slice %78 {offsets = [0, 0], sizes = [16, 32], strides = [1, 1]} : vector<16x64xf32> to vector<16x32xf32>
    %80 = vector.extract_strided_slice %78 {offsets = [0, 32], sizes = [16, 32], strides = [1, 1]} : vector<16x64xf32> to vector<16x32xf32>
    %81 = arith.addf %79, %80 : vector<16x32xf32>
    %82 = arith.addf %64, %81 : vector<16x32xf32>
    %c0_26 = arith.constant 0 : index
    %c0_27 = arith.constant 0 : index
    %83 = vector.load %arg5[%c0_26, %c0_27] : memref<16x32xf32, #tpu.memory_space<vmem>>, vector<16x32xf32>
    tpu.vector_store %arg5[%c0_26, %c0_27], %82 {strides = array<i32>} : memref<16x32xf32, #tpu.memory_space<vmem>>, vector<16x32xf32>,
    return
  }
  func.func @transform_0(%arg0: i32) -> (i32, i32) {
    %c0_i32 = arith.constant 0 : i32
    %c0_i32_0 = arith.constant 0 : i32
    return %arg0, %c0_i32 : i32, i32
  }
  func.func @transform_1(%arg0: i32) -> (i32, i32) {
    %c0_i32 = arith.constant 0 : i32
    %c0_i32_0 = arith.constant 0 : i32
    %c0_i32_1 = arith.constant 0 : i32
    return %c0_i32, %c0_i32_0 : i32, i32
  }
  func.func @transform_2(%arg0: i32) -> (i32, i32) {
    %c0_i32 = arith.constant 0 : i32
    %c0_i32_0 = arith.constant 0 : i32
    %c0_i32_1 = arith.constant 0 : i32
    return %c0_i32, %c0_i32_0 : i32, i32
  }
  func.func @transform_3(%arg0: i32) -> (i32, i32, i32) {
    %c0_i32 = arith.constant 0 : i32
    %c0_i32_0 = arith.constant 0 : i32
    %c0_i32_1 = arith.constant 0 : i32
    %c0_i32_2 = arith.constant 0 : i32
    return %c0_i32, %c0_i32_0, %c0_i32_1 : i32, i32, i32
  }
  func.func @transform_4(%arg0: i32) -> (i32, i32) {
    %c0_i32 = arith.constant 0 : i32
    %c0_i32_0 = arith.constant 0 : i32
    return %arg0, %c0_i32 : i32, i32
  }
}

</mosaic_0001>

<llo_original>
// kernel: bilinear_network_forward.1
$region0: #{bilinear_network_forward.1}
  #allocation0 [shape = 'u32[]', space=smem, size = 0x4, offset = 0x4, fixed_abs, tag = 'smem constant byte address 0x4 - core index']
  #allocation1 [shape = 'u32[144,128]{1,0:T(1,128)}', space=vmem, size = 0x12000, scoped, tag = 'internal scratch']
  %s0 = inlined_call_operand.hbm [shape: f32[16,32], index: 0, kind: input, shape index: {}]
  %s1 = inlined_call_operand.hbm [shape: bf16[32,2048], index: 1, kind: input, shape index: {}]
  %s2 = inlined_call_operand.hbm [shape: bf16[32,1024], index: 2, kind: input, shape index: {}]
  %s3 = inlined_call_operand.vmem [shape: f32[2,1,32], index: 3, kind: input, shape index: {}]
  %s4 = inlined_call_operand.hbm [shape: f32[16,32], index: 4, kind: output, shape index: {}]
  %s5 = sld [smem:[#allocation0]]
  $region38: #{bilinear_network_forward.1} parent=0
    _
  %s7 = ssub.s32 1, %s5
  %s8 = scalar_select 0, %s7, %s5
  $region1: #{bilinear_network_forward.1} parent=0
    #allocation2 [shape = 'u8[8192]{0}', space=vmem, size = 0x2000, scoped, tag = 'input window, operand 0, single buffered']
    #allocation3 [shape = 's32[1]{0}', space=sflag, size = 0x4, scoped, tag = 'scoped memory for bilinear_network_forward.1']
    #allocation4 [shape = 's32[1]{0}', space=sflag, size = 0x4, scoped, tag = 'scoped memory for bilinear_network_forward.1']
    #allocation5 [shape = 'u8[131072]{0}', space=vmem, size = 0x20000, scoped, tag = 'input window, operand 1, single buffered']
    #allocation6 [shape = 's32[1]{0}', space=sflag, size = 0x4, scoped, tag = 'scoped memory for bilinear_network_forward.1']
    #allocation7 [shape = 'u8[65536]{0}', space=vmem, size = 0x10000, scoped, tag = 'input window, operand 2, single buffered']
    #allocation8 [shape = 'u8[8192]{0}', space=vmem, size = 0x2000, scoped, tag = 'output window, operand 0, single buffered']
    %9 = vsyncpa [#allocation3], 0
    %10 = vsyncpa [#allocation6], 0
    %11 = vsyncpa [#allocation4], 0
    // Predicated region
    $region2: #{bilinear_network_forward.1} parent=1 // pred_check
      _
    $region3: #{bilinear_network_forward.1} parent=1 // pred_check_branch
      %13 = sbr.rel (0) target = $region5
    $region4: #{bilinear_network_forward.1} parent=1 // pred_region
      %s15 = ssub.s32 256, 256
      %16 = vsyncadd [#allocation3], %s15
      %s17 = sshll.u32 [#allocation2], 4
      %s18 = int_to_ptr.vmem [resolvable:$true] %s17
      %23 = dma.hbm_to_vmem [thread:$0]  %s0, 256, %s18, [#allocation3], 128, 128, 8
    $region5: #{bilinear_network_forward.1} parent=1 // pred_fallthru
      _
    // Predicated region
    $region6: #{bilinear_network_forward.1} parent=1 // pred_check
      _
    $region7: #{bilinear_network_forward.1} parent=1 // pred_check_branch
      %25 = sbr.rel (0) target = $region9
    $region8: #{bilinear_network_forward.1} parent=1 // pred_region
      %s27 = ssub.s32 4096, 4096
      %28 = vsyncadd [#allocation6], %s27
      %s29 = sshll.u32 [#allocation5], 4
      %s30 = int_to_ptr.vmem [resolvable:$true] %s29
      %35 = dma.hbm_to_vmem [thread:$0]  %s1, 4096, %s30, [#allocation6], 1024, 1024, 64
    $region9: #{bilinear_network_forward.1} parent=1 // pred_fallthru
      _
    // Predicated region
    $region10: #{bilinear_network_forward.1} parent=1 // pred_check
      _
    $region11: #{bilinear_network_forward.1} parent=1 // pred_check_branch
      %37 = sbr.rel (0) target = $region13
    $region12: #{bilinear_network_forward.1} parent=1 // pred_region
      %s39 = ssub.s32 2048, 2048
      %40 = vsyncadd [#allocation6], %s39
      %s41 = sshll.u32 [#allocation7], 4
      %s42 = int_to_ptr.vmem [resolvable:$true] %s41
      %47 = dma.hbm_to_vmem [thread:$0]  %s2, 2048, %s42, [#allocation6], 512, 512, 32
    $region13: #{bilinear_network_forward.1} parent=1 // pred_fallthru
      _
    // Predicated region
    $region14: #{bilinear_network_forward.1} parent=1 // pred_check
      _
    $region15: #{bilinear_network_forward.1} parent=1 // pred_check_branch
      %49 = sbr.rel (0) target = $region17
    $region16: #{bilinear_network_forward.1} parent=1 // pred_region
      _
    $region17: #{bilinear_network_forward.1} parent=1 // pred_fallthru
      _
    // Predicated region
    $region18: #{bilinear_network_forward.1} parent=1 // pred_check
      _
    $region19: #{bilinear_network_forward.1} parent=1 // pred_check_branch
      %51 = sbr.rel (0) target = $region21
    $region20: #{bilinear_network_forward.1} parent=1 // pred_region
      %52 = dma.done [#allocation3], 256
    $region21: #{bilinear_network_forward.1} parent=1 // pred_fallthru
      _
    // Predicated region
    $region22: #{bilinear_network_forward.1} parent=1 // pred_check
      _
    $region23: #{bilinear_network_forward.1} parent=1 // pred_check_branch
      %54 = sbr.rel (0) target = $region25
    $region24: #{bilinear_network_forward.1} parent=1 // pred_region
      %55 = dma.done [#allocation6], 4096
    $region25: #{bilinear_network_forward.1} parent=1 // pred_fallthru
      _
    // Predicated region
    $region26: #{bilinear_network_forward.1} parent=1 // pred_check
      _
    $region27: #{bilinear_network_forward.1} parent=1 // pred_check_branch
      %57 = sbr.rel (0) target = $region29
    $region28: #{bilinear_network_forward.1} parent=1 // pred_region
      %58 = dma.done [#allocation6], 2048
    $region29: #{bilinear_network_forward.1} parent=1 // pred_fallthru
      _
    %v60 = vld [vmem:[#allocation2] sm:$0xff]
    %v61 = vld [vmem:[#allocation2 + $0x8] sm:$0xff]
    %v62 = vpack.c.bf16 %v61, %v60
    %v63 = vld [vmem:[%s3] sm:$0x1]
    %v65 = vlaneseq
    %v66 = vshrl.u32 %v65, 7
    %v67 = vsub.s32 0, %v66
    %v68 = vrot.slane %v63, %v67
    %v70 = vadd.f32 %v60, %v68
    %v71 = vadd.f32 %v61, %v68
    %v72 = vld [vmem:[#allocation5] sm:$0xff]
    %v73 = vld [vmem:[#allocation5 + $0x8] sm:$0xff]
    %v74 = vld [vmem:[#allocation5 + $0x40] sm:$0xff]
    %v75 = vld [vmem:[#allocation5 + $0x48] sm:$0xff]
    %v76 = vld [vmem:[#allocation5 + $0x80] sm:$0xff]
    %v77 = vld [vmem:[#allocation5 + $0x88] sm:$0xff]
    %v78 = vld [vmem:[#allocation5 + $0xc0] sm:$0xff]
    %v79 = vld [vmem:[#allocation5 + $0xc8] sm:$0xff]
    %v80 = vld [vmem:[#allocation7] sm:$0xff]
    %v81 = vld [vmem:[#allocation7 + $0x8] sm:$0xff]
    %v82 = vld [vmem:[#allocation7 + $0x20] sm:$0xff]
    %v83 = vld [vmem:[#allocation7 + $0x28] sm:$0xff]
    %v84 = vld [vmem:[#allocation7 + $0x40] sm:$0xff]
    %v85 = vld [vmem:[#allocation7 + $0x48] sm:$0xff]
    %v86 = vld [vmem:[#allocation7 + $0x60] sm:$0xff]
    %v87 = vld [vmem:[#allocation7 + $0x68] sm:$0xff]
    %v96 = vunpack.c.l.b16 %v72
    %v97 = vunpack.c.h.b16 %v72
    %v98 = vunpack.c.l.b16 %v73
    %v99 = vunpack.c.h.b16 %v73
    %v100 = vunpack.c.l.b16 %v74
    %v101 = vunpack.c.h.b16 %v74
    %v102 = vunpack.c.l.b16 %v75
    %v103 = vunpack.c.h.b16 %v75
    %v104 = vunpack.c.l.b16 %v76
    %v105 = vunpack.c.h.b16 %v76
    %v106 = vunpack.c.l.b16 %v77
    %v107 = vunpack.c.h.b16 %v77
    %v108 = vunpack.c.l.b16 %v78
    %v109 = vunpack.c.h.b16 %v78
    %v110 = vunpack.c.l.b16 %v79
    %v111 = vunpack.c.h.b16 %v79
    %v112 = vpack.c.b16 %v100, %v96
    %v113 = vpack.c.b16 %v101, %v97
    %v114 = vpack.c.b16 %v102, %v98
    %v115 = vpack.c.b16 %v103, %v99
    %v116 = vpack.c.b16 %v108, %v104
    %v117 = vpack.c.b16 %v109, %v105
    %v118 = vpack.c.b16 %v110, %v106
    %v119 = vpack.c.b16 %v111, %v107
    %vm128 = vcmask 261120
    %v130 = vsel %vm128, %v62, 0
    %132 = vmatprep.subr.bf16.mxu0 %v113
    %133 = vmatpush1.bf16.msra.mxu0 %v112
    %134 = vmatprep.subr.bf16.mxu0 %v117
    %135 = vmatpush1.bf16.msra.mxu0 %v116
    %136 = vmatprep.subr.bf16.mxu0 0
    %137 = vmatpush1.bf16.msra.mxu0 0
    %138 = vmatprep.subr.bf16.mxu0 0
    %139 = vmatpush1.bf16.msra.mxu0 0
    %140 = vmatprep.subr.bf16.mxu0 0
    %141 = vmatpush1.bf16.msra.mxu0 0
    %142 = vmatprep.subr.bf16.mxu0 0
    %143 = vmatpush1.bf16.msra.mxu0 0
    %144 = vmatprep.subr.bf16.mxu0 0
    %145 = vmatpush1.bf16.msra.mxu0 0
    %146 = vmatprep.subr.bf16.mxu0 0
    %147 = vmatpush1.bf16.msra.mxu0 0
    %148 = vmatprep.subr.bf16.mxu0 0
    %149 = vmatpush1.bf16.msra.mxu0 0
    %150 = vmatprep.subr.bf16.mxu0 0
    %151 = vmatpush1.bf16.msra.mxu0 0
    %152 = vmatprep.subr.bf16.mxu0 0
    %153 = vmatpush1.bf16.msra.mxu0 0
    %154 = vmatprep.subr.bf16.mxu0 0
    %155 = vmatpush1.bf16.msra.mxu0 0
    %156 = vmatprep.subr.bf16.mxu0 0
    %157 = vmatpush1.bf16.msra.mxu0 0
    %158 = vmatprep.subr.bf16.mxu0 0
    %159 = vmatpush1.bf16.msra.mxu0 0
    %160 = vmatprep.subr.bf16.mxu0 0
    %161 = vmatpush1.bf16.msra.mxu0 0
    %162 = vmatprep.subr.bf16.mxu0 0
    %163 = vmatpush1.bf16.msra.mxu0 0
    %164 = vmatprep.mubr.bf16.mxu0 0
    %165 = vmatmul.mubr.bf16.gmra.mrb[0].mxu0 %v130
    %v166 = vpop.f32.mrb[0].mxu0
    %v167 = vadd.f32 0.0, %v166
    %v168 = vpop.f32.mrb[0].mxu0
    %v169 = vadd.f32 0.0, %v168
    %v170 = vpop.f32.mrb[0].mxu0
    %v171 = vadd.f32 0.0, %v170
    %v172 = vpop.f32.mrb[0].mxu0
    %v173 = vadd.f32 0.0, %v172
    %174 = vdwg.mxu0
    %175 = vmatprep.subr.bf16.mxu0 %v115
    %176 = vmatpush1.bf16.msra.mxu0 %v114
    %177 = vmatprep.subr.bf16.mxu0 %v119
    %178 = vmatpush1.bf16.msra.mxu0 %v118
    %179 = vmatprep.subr.bf16.mxu0 0
    %180 = vmatpush1.bf16.msra.mxu0 0
    %181 = vmatprep.subr.bf16.mxu0 0
    %182 = vmatpush1.bf16.msra.mxu0 0
    %183 = vmatprep.subr.bf16.mxu0 0
    %184 = vmatpush1.bf16.msra.mxu0 0
    %185 = vmatprep.subr.bf16.mxu0 0
    %186 = vmatpush1.bf16.msra.mxu0 0
    %187 = vmatprep.subr.bf16.mxu0 0
    %188 = vmatpush1.bf16.msra.mxu0 0
    %189 = vmatprep.subr.bf16.mxu0 0
    %190 = vmatpush1.bf16.msra.mxu0 0
    %191 = vmatprep.subr.bf16.mxu0 0
    %192 = vmatpush1.bf16.msra.mxu0 0
    %193 = vmatprep.subr.bf16.mxu0 0
    %194 = vmatpush1.bf16.msra.mxu0 0
    %195 = vmatprep.subr.bf16.mxu0 0
    %196 = vmatpush1.bf16.msra.mxu0 0
    %197 = vmatprep.subr.bf16.mxu0 0
    %198 = vmatpush1.bf16.msra.mxu0 0
    %199 = vmatprep.subr.bf16.mxu0 0
    %200 = vmatpush1.bf16.msra.mxu0 0
    %201 = vmatprep.subr.bf16.mxu0 0
    %202 = vmatpush1.bf16.msra.mxu0 0
    %203 = vmatprep.subr.bf16.mxu0 0
    %204 = vmatpush1.bf16.msra.mxu0 0
    %205 = vmatprep.subr.bf16.mxu0 0
    %206 = vmatpush1.bf16.msra.mxu0 0
    %207 = vmatprep.mubr.bf16.mxu0 0
    %208 = vmatmul.mubr.bf16.gmra.mrb[0].mxu0 %v130
    %v209 = vpop.f32.mrb[0].mxu0
    %v210 = vadd.f32 0.0, %v209
    %v211 = vpop.f32.mrb[0].mxu0
    %v212 = vadd.f32 0.0, %v211
    %v213 = vpop.f32.mrb[0].mxu0
    %v214 = vadd.f32 0.0, %v213
    %v215 = vpop.f32.mrb[0].mxu0
    %v216 = vadd.f32 0.0, %v215
    %217 = vdwg.mxu0
    %v226 = vunpack.c.l.b16 %v80
    %v227 = vunpack.c.h.b16 %v80
    %v228 = vunpack.c.l.b16 %v81
    %v229 = vunpack.c.h.b16 %v81
    %v230 = vunpack.c.l.b16 %v82
    %v231 = vunpack.c.h.b16 %v82
    %v232 = vunpack.c.l.b16 %v83
    %v233 = vunpack.c.h.b16 %v83
    %v234 = vunpack.c.l.b16 %v84
    %v235 = vunpack.c.h.b16 %v84
    %v236 = vunpack.c.l.b16 %v85
    %v237 = vunpack.c.h.b16 %v85
    %v238 = vunpack.c.l.b16 %v86
    %v239 = vunpack.c.h.b16 %v86
    %v240 = vunpack.c.l.b16 %v87
    %v241 = vunpack.c.h.b16 %v87
    %v242 = vpack.c.b16 %v230, %v226
    %v243 = vpack.c.b16 %v231, %v227
    %v244 = vpack.c.b16 %v232, %v228
    %v245 = vpack.c.b16 %v233, %v229
    %v246 = vpack.c.b16 %v238, %v234
    %v247 = vpack.c.b16 %v239, %v235
    %v248 = vpack.c.b16 %v240, %v236
    %v249 = vpack.c.b16 %v241, %v237
    %258 = vmatprep.subr.bf16.mxu0 %v243
    %259 = vmatpush1.bf16.msra.mxu0 %v242
    %260 = vmatprep.subr.bf16.mxu0 %v247
    %261 = vmatpush1.bf16.msra.mxu0 %v246
    %262 = vmatprep.subr.bf16.mxu0 0
    %263 = vmatpush1.bf16.msra.mxu0 0
    %264 = vmatprep.subr.bf16.mxu0 0
    %265 = vmatpush1.bf16.msra.mxu0 0
    %266 = vmatprep.subr.bf16.mxu0 0
    %267 = vmatpush1.bf16.msra.mxu0 0
    %268 = vmatprep.subr.bf16.mxu0 0
    %269 = vmatpush1.bf16.msra.mxu0 0
    %270 = vmatprep.subr.bf16.mxu0 0
    %271 = vmatpush1.bf16.msra.mxu0 0
    %272 = vmatprep.subr.bf16.mxu0 0
    %273 = vmatpush1.bf16.msra.mxu0 0
    %274 = vmatprep.subr.bf16.mxu0 0
    %275 = vmatpush1.bf16.msra.mxu0 0
    %276 = vmatprep.subr.bf16.mxu0 0
    %277 = vmatpush1.bf16.msra.mxu0 0
    %278 = vmatprep.subr.bf16.mxu0 0
    %279 = vmatpush1.bf16.msra.mxu0 0
    %280 = vmatprep.subr.bf16.mxu0 0
    %281 = vmatpush1.bf16.msra.mxu0 0
    %282 = vmatprep.subr.bf16.mxu0 0
    %283 = vmatpush1.bf16.msra.mxu0 0
    %284 = vmatprep.subr.bf16.mxu0 0
    %285 = vmatpush1.bf16.msra.mxu0 0
    %286 = vmatprep.subr.bf16.mxu0 0
    %287 = vmatpush1.bf16.msra.mxu0 0
    %288 = vmatprep.subr.bf16.mxu0 0
    %289 = vmatpush1.bf16.msra.mxu0 0
    %290 = vmatprep.mubr.bf16.mxu0 0
    %291 = vmatmul.mubr.bf16.gmra.mrb[0].mxu0 %v130
    %v292 = vpop.f32.mrb[0].mxu0
    %v293 = vadd.f32 0.0, %v292
    %v294 = vpop.f32.mrb[0].mxu0
    %v295 = vadd.f32 0.0, %v294
    %v296 = vpop.f32.mrb[0].mxu0
    %v297 = vadd.f32 0.0, %v296
    %v298 = vpop.f32.mrb[0].mxu0
    %v299 = vadd.f32 0.0, %v298
    %300 = vdwg.mxu0
    %301 = vmatprep.subr.bf16.mxu0 %v245
    %302 = vmatpush1.bf16.msra.mxu0 %v244
    %303 = vmatprep.subr.bf16.mxu0 %v249
    %304 = vmatpush1.bf16.msra.mxu0 %v248
    %305 = vmatprep.subr.bf16.mxu0 0
    %306 = vmatpush1.bf16.msra.mxu0 0
    %307 = vmatprep.subr.bf16.mxu0 0
    %308 = vmatpush1.bf16.msra.mxu0 0
    %309 = vmatprep.subr.bf16.mxu0 0
    %310 = vmatpush1.bf16.msra.mxu0 0
    %311 = vmatprep.subr.bf16.mxu0 0
    %312 = vmatpush1.bf16.msra.mxu0 0
    %313 = vmatprep.subr.bf16.mxu0 0
    %314 = vmatpush1.bf16.msra.mxu0 0
    %315 = vmatprep.subr.bf16.mxu0 0
    %316 = vmatpush1.bf16.msra.mxu0 0
    %317 = vmatprep.subr.bf16.mxu0 0
    %318 = vmatpush1.bf16.msra.mxu0 0
    %319 = vmatprep.subr.bf16.mxu0 0
    %320 = vmatpush1.bf16.msra.mxu0 0
    %321 = vmatprep.subr.bf16.mxu0 0
    %322 = vmatpush1.bf16.msra.mxu0 0
    %323 = vmatprep.subr.bf16.mxu0 0
    %324 = vmatpush1.bf16.msra.mxu0 0
    %325 = vmatprep.subr.bf16.mxu0 0
    %326 = vmatpush1.bf16.msra.mxu0 0
    %327 = vmatprep.subr.bf16.mxu0 0
    %328 = vmatpush1.bf16.msra.mxu0 0
    %329 = vmatprep.subr.bf16.mxu0 0
    %330 = vmatpush1.bf16.msra.mxu0 0
    %331 = vmatprep.subr.bf16.mxu0 0
    %332 = vmatpush1.bf16.msra.mxu0 0
    %333 = vmatprep.mubr.bf16.mxu0 0
    %334 = vmatmul.mubr.bf16.gmra.mrb[0].mxu0 %v130
    %v335 = vpop.f32.mrb[0].mxu0
    %v336 = vadd.f32 0.0, %v335
    %v337 = vpop.f32.mrb[0].mxu0
    %v338 = vadd.f32 0.0, %v337
    %v339 = vpop.f32.mrb[0].mxu0
    %v340 = vadd.f32 0.0, %v339
    %v341 = vpop.f32.mrb[0].mxu0
    %v342 = vadd.f32 0.0, %v341
    %343 = vdwg.mxu0
    %v344 = vmul.f32 %v167, %v293
    %v345 = vmul.f32 %v169, %v295
    %v346 = vmul.f32 %v210, %v336
    %v347 = vmul.f32 %v212, %v338
    %v348 = vmul.f32 %v171, %v297
    %v349 = vmul.f32 %v173, %v299
    %v350 = vmul.f32 %v214, %v340
    %v351 = vmul.f32 %v216, %v342
    %v352 = vadd.f32 %v344, %v346
    %v353 = vadd.f32 %v345, %v347
    %v354 = vadd.f32 %v348, %v350
    %v355 = vadd.f32 %v349, %v351
    %v356 = vadd.f32 %v352, %v353
    %v357 = vadd.f32 %v354, %v355
    %360 = vrot.lane.b32.xlu0 %v356, 64
    %v361 = vpop.permute.xlu0 %360
    %362 = vrot.lane.b32.xlu0 %v357, 64
    %v363 = vpop.permute.xlu0 %362
    %v366 = vadd.f32 %v356, %v361
    %v367 = vadd.f32 %v357, %v363
    %370 = vrot.lane.b32.xlu0 %v366, 96
    %v371 = vpop.permute.xlu0 %370
    %372 = vrot.lane.b32.xlu0 %v367, 96
    %v373 = vpop.permute.xlu0 %372
    %v376 = vadd.f32 %v366, %v371
    %v377 = vadd.f32 %v367, %v373
    %v378 = vadd.f32 %v70, %v376
    %v379 = vadd.f32 %v71, %v377
    %v380 = vld [vmem:[#allocation5 + $0x10] sm:$0xff]
    %v381 = vld [vmem:[#allocation5 + $0x18] sm:$0xff]
    %v382 = vld [vmem:[#allocation5 + $0x50] sm:$0xff]
    %v383 = vld [vmem:[#allocation5 + $0x58] sm:$0xff]
    %v384 = vld [vmem:[#allocation5 + $0x90] sm:$0xff]
    %v385 = vld [vmem:[#allocation5 + $0x98] sm:$0xff]
    %v386 = vld [vmem:[#allocation5 + $0xd0] sm:$0xff]
    %v387 = vld [vmem:[#allocation5 + $0xd8] sm:$0xff]
    %v388 = vld [vmem:[#allocation7 + $0x10] sm:$0xff]
    %v389 = vld [vmem:[#allocation7 + $0x18] sm:$0xff]
    %v390 = vld [vmem:[#allocation7 + $0x30] sm:$0xff]
    %v391 = vld [vmem:[#allocation7 + $0x38] sm:$0xff]
    %v392 = vld [vmem:[#allocation7 + $0x50] sm:$0xff]
    %v393 = vld [vmem:[#allocation7 + $0x58] sm:$0xff]
    %v394 = vld [vmem:[#allocation7 + $0x70] sm:$0xff]
    %v395 = vld [vmem:[#allocation7 + $0x78] sm:$0xff]
    %v404 = vunpack.c.l.b16 %v380
    %v405 = vunpack.c.h.b16 %v380
    %v406 = vunpack.c.l.b16 %v381
    %v407 = vunpack.c.h.b16 %v381
    %v408 = vunpack.c.l.b16 %v382
    %v409 = vunpack.c.h.b16 %v382
    %v410 = vunpack.c.l.b16 %v383
    %v411 = vunpack.c.h.b16 %v383
    %v412 = vunpack.c.l.b16 %v384
    %v413 = vunpack.c.h.b16 %v384
    %v414 = vunpack.c.l.b16 %v385
    %v415 = vunpack.c.h.b16 %v385
    %v416 = vunpack.c.l.b16 %v386
    %v417 = vunpack.c.h.b16 %v386
    %v418 = vunpack.c.l.b16 %v387
    %v419 = vunpack.c.h.b16 %v387
    %v420 = vpack.c.b16 %v408, %v404
    %v421 = vpack.c.b16 %v409, %v405
    %v422 = vpack.c.b16 %v410, %v406
    %v423 = vpack.c.b16 %v411, %v407
    %v424 = vpack.c.b16 %v416, %v412
    %v425 = vpack.c.b16 %v417, %v413
    %v426 = vpack.c.b16 %v418, %v414
    %v427 = vpack.c.b16 %v419, %v415
    %436 = vmatprep.subr.bf16.mxu0 %v421
    %437 = vmatpush1.bf16.msra.mxu0 %v420
    %438 = vmatprep.subr.bf16.mxu0 %v425
    %439 = vmatpush1.bf16.msra.mxu0 %v424
    %440 = vmatprep.subr.bf16.mxu0 0
    %441 = vmatpush1.bf16.msra.mxu0 0
    %442 = vmatprep.subr.bf16.mxu0 0
    %443 = vmatpush1.bf16.msra.mxu0 0
    %444 = vmatprep.subr.bf16.mxu0 0
    %445 = vmatpush1.bf16.msra.mxu0 0
    %446 = vmatprep.subr.bf16.mxu0 0
    %447 = vmatpush1.bf16.msra.mxu0 0
    %448 = vmatprep.subr.bf16.mxu0 0
    %449 = vmatpush1.bf16.msra.mxu0 0
    %450 = vmatprep.subr.bf16.mxu0 0
    %451 = vmatpush1.bf16.msra.mxu0 0
    %452 = vmatprep.subr.bf16.mxu0 0
    %453 = vmatpush1.bf16.msra.mxu0 0
    %454 = vmatprep.subr.bf16.mxu0 0
    %455 = vmatpush1.bf16.msra.mxu0 0
    %456 = vmatprep.subr.bf16.mxu0 0
    %457 = vmatpush1.bf16.msra.mxu0 0
    %458 = vmatprep.subr.bf16.mxu0 0
    %459 = vmatpush1.bf16.msra.mxu0 0
    %460 = vmatprep.subr.bf16.mxu0 0
    %461 = vmatpush1.bf16.msra.mxu0 0
    %462 = vmatprep.subr.bf16.mxu0 0
    %463 = vmatpush1.bf16.msra.mxu0 0
    %464 = vmatprep.subr.bf16.mxu0 0
    %465 = vmatpush1.bf16.msra.mxu0 0
    %466 = vmatprep.subr.bf16.mxu0 0
    %467 = vmatpush1.bf16.msra.mxu0 0
    %468 = vmatprep.mubr.bf16.mxu0 0
    %469 = vmatmul.mubr.bf16.gmra.mrb[0].mxu0 %v130
    %v470 = vpop.f32.mrb[0].mxu0
    %v471 = vadd.f32 0.0, %v470
    %v472 = vpop.f32.mrb[0].mxu0
    %v473 = vadd.f32 0.0, %v472
    %v474 = vpop.f32.mrb[0].mxu0
    %v475 = vadd.f32 0.0, %v474
    %v476 = vpop.f32.mrb[0].mxu0
    %v477 = vadd.f32 0.0, %v476
    %478 = vdwg.mxu0
    %479 = vmatprep.subr.bf16.mxu0 %v423
    %480 = vmatpush1.bf16.msra.mxu0 %v422
    %481 = vmatprep.subr.bf16.mxu0 %v427
    %482 = vmatpush1.bf16.msra.mxu0 %v426
    %483 = vmatprep.subr.bf16.mxu0 0
    %484 = vmatpush1.bf16.msra.mxu0 0
    %485 = vmatprep.subr.bf16.mxu0 0
    %486 = vmatpush1.bf16.msra.mxu0 0
    %487 = vmatprep.subr.bf16.mxu0 0
    %488 = vmatpush1.bf16.msra.mxu0 0
    %489 = vmatprep.subr.bf16.mxu0 0
    %490 = vmatpush1.bf16.msra.mxu0 0
    %491 = vmatprep.subr.bf16.mxu0 0
    %492 = vmatpush1.bf16.msra.mxu0 0
    %493 = vmatprep.subr.bf16.mxu0 0
    %494 = vmatpush1.bf16.msra.mxu0 0
    %495 = vmatprep.subr.bf16.mxu0 0
    %496 = vmatpush1.bf16.msra.mxu0 0
    %497 = vmatprep.subr.bf16.mxu0 0
    %498 = vmatpush1.bf16.msra.mxu0 0
    %499 = vmatprep.subr.bf16.mxu0 0
    %500 = vmatpush1.bf16.msra.mxu0 0
    %501 = vmatprep.subr.bf16.mxu0 0
    %502 = vmatpush1.bf16.msra.mxu0 0
    %503 = vmatprep.subr.bf16.mxu0 0
    %504 = vmatpush1.bf16.msra.mxu0 0
    %505 = vmatprep.subr.bf16.mxu0 0
    %506 = vmatpush1.bf16.msra.mxu0 0
    %507 = vmatprep.subr.bf16.mxu0 0
    %508 = vmatpush1.bf16.msra.mxu0 0
    %509 = vmatprep.subr.bf16.mxu0 0
    %510 = vmatpush1.bf16.msra.mxu0 0
    %511 = vmatprep.mubr.bf16.mxu0 0
    %512 = vmatmul.mubr.bf16.gmra.mrb[0].mxu0 %v130
    %v513 = vpop.f32.mrb[0].mxu0
    %v514 = vadd.f32 0.0, %v513
    %v515 = vpop.f32.mrb[0].mxu0
    %v516 = vadd.f32 0.0, %v515
    %v517 = vpop.f32.mrb[0].mxu0
    %v518 = vadd.f32 0.0, %v517
    %v519 = vpop.f32.mrb[0].mxu0
    %v520 = vadd.f32 0.0, %v519
    %521 = vdwg.mxu0
    %v530 = vunpack.c.l.b16 %v388
    %v531 = vunpack.c.h.b16 %v388
    %v532 = vunpack.c.l.b16 %v389
    %v533 = vunpack.c.h.b16 %v389
    %v534 = vunpack.c.l.b16 %v390
    %v535 = vunpack.c.h.b16 %v390
    %v536 = vunpack.c.l.b16 %v391
    %v537 = vunpack.c.h.b16 %v391
    %v538 = vunpack.c.l.b16 %v392
    %v539 = vunpack.c.h.b16 %v392
    %v540 = vunpack.c.l.b16 %v393
    %v541 = vunpack.c.h.b16 %v393
    %v542 = vunpack.c.l.b16 %v394
    %v543 = vunpack.c.h.b16 %v394
    %v544 = vunpack.c.l.b16 %v395
    %v545 = vunpack.c.h.b16 %v395
    %v546 = vpack.c.b16 %v534, %v530
    %v547 = vpack.c.b16 %v535, %v531
    %v548 = vpack.c.b16 %v536, %v532
    %v549 = vpack.c.b16 %v537, %v533
    %v550 = vpack.c.b16 %v542, %v538
    %v551 = vpack.c.b16 %v543, %v539
    %v552 = vpack.c.b16 %v544, %v540
    %v553 = vpack.c.b16 %v545, %v541
    %562 = vmatprep.subr.bf16.mxu0 %v547
    %563 = vmatpush1.bf16.msra.mxu0 %v546
    %564 = vmatprep.subr.bf16.mxu0 %v551
    %565 = vmatpush1.bf16.msra.mxu0 %v550
    %566 = vmatprep.subr.bf16.mxu0 0
    %567 = vmatpush1.bf16.msra.mxu0 0
    %568 = vmatprep.subr.bf16.mxu0 0
    %569 = vmatpush1.bf16.msra.mxu0 0
    %570 = vmatprep.subr.bf16.mxu0 0
    %571 = vmatpush1.bf16.msra.mxu0 0
    %572 = vmatprep.subr.bf16.mxu0 0
    %573 = vmatpush1.bf16.msra.mxu0 0
    %574 = vmatprep.subr.bf16.mxu0 0
    %575 = vmatpush1.bf16.msra.mxu0 0
    %576 = vmatprep.subr.bf16.mxu0 0
    %577 = vmatpush1.bf16.msra.mxu0 0
    %578 = vmatprep.subr.bf16.mxu0 0
    %579 = vmatpush1.bf16.msra.mxu0 0
    %580 = vmatprep.subr.bf16.mxu0 0
    %581 = vmatpush1.bf16.msra.mxu0 0
    %582 = vmatprep.subr.bf16.mxu0 0
    %583 = vmatpush1.bf16.msra.mxu0 0
    %584 = vmatprep.subr.bf16.mxu0 0
    %585 = vmatpush1.bf16.msra.mxu0 0
    %586 = vmatprep.subr.bf16.mxu0 0
    %587 = vmatpush1.bf16.msra.mxu0 0
    %588 = vmatprep.subr.bf16.mxu0 0
    %589 = vmatpush1.bf16.msra.mxu0 0
    %590 = vmatprep.subr.bf16.mxu0 0
    %591 = vmatpush1.bf16.msra.mxu0 0
    %592 = vmatprep.subr.bf16.mxu0 0
    %593 = vmatpush1.bf16.msra.mxu0 0
    %594 = vmatprep.mubr.bf16.mxu0 0
    %595 = vmatmul.mubr.bf16.gmra.mrb[0].mxu0 %v130
    %v596 = vpop.f32.mrb[0].mxu0
    %v597 = vadd.f32 0.0, %v596
    %v598 = vpop.f32.mrb[0].mxu0
    %v599 = vadd.f32 0.0, %v598
    %v600 = vpop.f32.mrb[0].mxu0
    %v601 = vadd.f32 0.0, %v600
    %v602 = vpop.f32.mrb[0].mxu0
    %v603 = vadd.f32 0.0, %v602
    %604 = vdwg.mxu0
    %605 = vmatprep.subr.bf16.mxu0 %v549
    %606 = vmatpush1.bf16.msra.mxu0 %v548
    %607 = vmatprep.subr.bf16.mxu0 %v553
    %608 = vmatpush1.bf16.msra.mxu0 %v552
    %609 = vmatprep.subr.bf16.mxu0 0
    %610 = vmatpush1.bf16.msra.mxu0 0
    %611 = vmatprep.subr.bf16.mxu0 0
    %612 = vmatpush1.bf16.msra.mxu0 0
    %613 = vmatprep.subr.bf16.mxu0 0
    %614 = vmatpush1.bf16.msra.mxu0 0
    %615 = vmatprep.subr.bf16.mxu0 0
    %616 = vmatpush1.bf16.msra.mxu0 0
    %617 = vmatprep.subr.bf16.mxu0 0
    %618 = vmatpush1.bf16.msra.mxu0 0
    %619 = vmatprep.subr.bf16.mxu0 0
    %620 = vmatpush1.bf16.msra.mxu0 0
    %621 = vmatprep.subr.bf16.mxu0 0
    %622 = vmatpush1.bf16.msra.mxu0 0
    %623 = vmatprep.subr.bf16.mxu0 0
    %624 = vmatpush1.bf16.msra.mxu0 0
    %625 = vmatprep.subr.bf16.mxu0 0
    %626 = vmatpush1.bf16.msra.mxu0 0
    %627 = vmatprep.subr.bf16.mxu0 0
    %628 = vmatpush1.bf16.msra.mxu0 0
    %629 = vmatprep.subr.bf16.mxu0 0
    %630 = vmatpush1.bf16.msra.mxu0 0
    %631 = vmatprep.subr.bf16.mxu0 0
    %632 = vmatpush1.bf16.msra.mxu0 0
    %633 = vmatprep.subr.bf16.mxu0 0
    %634 = vmatpush1.bf16.msra.mxu0 0
    %635 = vmatprep.subr.bf16.mxu0 0
    %636 = vmatpush1.bf16.msra.mxu0 0
    %637 = vmatprep.mubr.bf16.mxu0 0
    %638 = vmatmul.mubr.bf16.gmra.mrb[0].mxu0 %v130
    %v639 = vpop.f32.mrb[0].mxu0
    %v640 = vadd.f32 0.0, %v639
    %v641 = vpop.f32.mrb[0].mxu0
    %v642 = vadd.f32 0.0, %v641
    %v643 = vpop.f32.mrb[0].mxu0
    %v644 = vadd.f32 0.0, %v643
    %v645 = vpop.f32.mrb[0].mxu0
    %v646 = vadd.f32 0.0, %v645
    %647 = vdwg.mxu0
    %v648 = vmul.f32 %v471, %v597
    %v649 = vmul.f32 %v473, %v599
    %v650 = vmul.f32 %v514, %v640
    %v651 = vmul.f32 %v516, %v642
    %v652 = vmul.f32 %v475, %v601
    %v653 = vmul.f32 %v477, %v603
    %v654 = vmul.f32 %v518, %v644
    %v655 = vmul.f32 %v520, %v646
    %v656 = vadd.f32 %v648, %v650
    %v657 = vadd.f32 %v649, %v651
    %v658 = vadd.f32 %v652, %v654
    %v659 = vadd.f32 %v653, %v655
    %v660 = vadd.f32 %v656, %v657
    %v661 = vadd.f32 %v658, %v659
    %664 = vrot.lane.b32.xlu0 %v660, 64
    %v665 = vpop.permute.xlu0 %664
    %666 = vrot.lane.b32.xlu0 %v661, 64
    %v667 = vpop.permute.xlu0 %666
    %v670 = vadd.f32 %v660, %v665
    %v671 = vadd.f32 %v661, %v667
    %674 = vrot.lane.b32.xlu0 %v670, 96
    %v675 = vpop.permute.xlu0 %674
    %676 = vrot.lane.b32.xlu0 %v671, 96
    %v677 = vpop.permute.xlu0 %676
    %v680 = vadd.f32 %v670, %v675
    %v681 = vadd.f32 %v671, %v677
    %v682 = vadd.f32 %v378, %v680
    %v683 = vadd.f32 %v379, %v681
    %v684 = vpack.c.bf16 %v683, %v682
    %s685 = scalar_lea.vmem %s3, 1
    %v686 = vld [vmem:[%s685] sm:$0x1]
    %v688 = vlaneseq
    %v689 = vshrl.u32 %v688, 7
    %v690 = vsub.s32 0, %v689
    %v691 = vrot.slane %v686, %v690
    %v693 = vadd.f32 %v60, %v691
    %v694 = vadd.f32 %v61, %v691
    %v695 = vld [vmem:[#allocation5 + $0x20] sm:$0xff]
    %v696 = vld [vmem:[#allocation5 + $0x28] sm:$0xff]
    %v697 = vld [vmem:[#allocation5 + $0x60] sm:$0xff]
    %v698 = vld [vmem:[#allocation5 + $0x68] sm:$0xff]
    %v699 = vld [vmem:[#allocation5 + $0xa0] sm:$0xff]
    %v700 = vld [vmem:[#allocation5 + $0xa8] sm:$0xff]
    %v701 = vld [vmem:[#allocation5 + $0xe0] sm:$0xff]
    %v702 = vld [vmem:[#allocation5 + $0xe8] sm:$0xff]
    %v711 = vunpack.c.l.b16 %v695
    %v712 = vunpack.c.h.b16 %v695
    %v713 = vunpack.c.l.b16 %v696
    %v714 = vunpack.c.h.b16 %v696
    %v715 = vunpack.c.l.b16 %v697
    %v716 = vunpack.c.h.b16 %v697
    %v717 = vunpack.c.l.b16 %v698
    %v718 = vunpack.c.h.b16 %v698
    %v719 = vunpack.c.l.b16 %v699
    %v720 = vunpack.c.h.b16 %v699
    %v721 = vunpack.c.l.b16 %v700
    %v722 = vunpack.c.h.b16 %v700
    %v723 = vunpack.c.l.b16 %v701
    %v724 = vunpack.c.h.b16 %v701
    %v725 = vunpack.c.l.b16 %v702
    %v726 = vunpack.c.h.b16 %v702
    %v727 = vpack.c.b16 %v715, %v711
    %v728 = vpack.c.b16 %v716, %v712
    %v729 = vpack.c.b16 %v717, %v713
    %v730 = vpack.c.b16 %v718, %v714
    %v731 = vpack.c.b16 %v723, %v719
    %v732 = vpack.c.b16 %v724, %v720
    %v733 = vpack.c.b16 %v725, %v721
    %v734 = vpack.c.b16 %v726, %v722
    %743 = vmatprep.subr.bf16.mxu0 %v728
    %744 = vmatpush1.bf16.msra.mxu0 %v727
    %745 = vmatprep.subr.bf16.mxu0 %v732
    %746 = vmatpush1.bf16.msra.mxu0 %v731
    %747 = vmatprep.subr.bf16.mxu0 0
    %748 = vmatpush1.bf16.msra.mxu0 0
    %749 = vmatprep.subr.bf16.mxu0 0
    %750 = vmatpush1.bf16.msra.mxu0 0
    %751 = vmatprep.subr.bf16.mxu0 0
    %752 = vmatpush1.bf16.msra.mxu0 0
    %753 = vmatprep.subr.bf16.mxu0 0
    %754 = vmatpush1.bf16.msra.mxu0 0
    %755 = vmatprep.subr.bf16.mxu0 0
    %756 = vmatpush1.bf16.msra.mxu0 0
    %757 = vmatprep.subr.bf16.mxu0 0
    %758 = vmatpush1.bf16.msra.mxu0 0
    %759 = vmatprep.subr.bf16.mxu0 0
    %760 = vmatpush1.bf16.msra.mxu0 0
    %761 = vmatprep.subr.bf16.mxu0 0
    %762 = vmatpush1.bf16.msra.mxu0 0
    %763 = vmatprep.subr.bf16.mxu0 0
    %764 = vmatpush1.bf16.msra.mxu0 0
    %765 = vmatprep.subr.bf16.mxu0 0
    %766 = vmatpush1.bf16.msra.mxu0 0
    %767 = vmatprep.subr.bf16.mxu0 0
    %768 = vmatpush1.bf16.msra.mxu0 0
    %769 = vmatprep.subr.bf16.mxu0 0
    %770 = vmatpush1.bf16.msra.mxu0 0
    %771 = vmatprep.subr.bf16.mxu0 0
    %772 = vmatpush1.bf16.msra.mxu0 0
    %773 = vmatprep.subr.bf16.mxu0 0
    %774 = vmatpush1.bf16.msra.mxu0 0
    %775 = vmatprep.mubr.bf16.mxu0 0
    %776 = vmatmul.mubr.bf16.gmra.mrb[0].mxu0 %v130
    %v777 = vpop.f32.mrb[0].mxu0
    %v778 = vadd.f32 0.0, %v777
    %v779 = vpop.f32.mrb[0].mxu0
    %v780 = vadd.f32 0.0, %v779
    %v781 = vpop.f32.mrb[0].mxu0
    %v782 = vadd.f32 0.0, %v781
    %v783 = vpop.f32.mrb[0].mxu0
    %v784 = vadd.f32 0.0, %v783
    %785 = vdwg.mxu0
    %786 = vmatprep.subr.bf16.mxu0 %v730
    %787 = vmatpush1.bf16.msra.mxu0 %v729
    %788 = vmatprep.subr.bf16.mxu0 %v734
    %789 = vmatpush1.bf16.msra.mxu0 %v733
    %790 = vmatprep.subr.bf16.mxu0 0
    %791 = vmatpush1.bf16.msra.mxu0 0
    %792 = vmatprep.subr.bf16.mxu0 0
    %793 = vmatpush1.bf16.msra.mxu0 0
    %794 = vmatprep.subr.bf16.mxu0 0
    %795 = vmatpush1.bf16.msra.mxu0 0
    %796 = vmatprep.subr.bf16.mxu0 0
    %797 = vmatpush1.bf16.msra.mxu0 0
    %798 = vmatprep.subr.bf16.mxu0 0
    %799 = vmatpush1.bf16.msra.mxu0 0
    %800 = vmatprep.subr.bf16.mxu0 0
    %801 = vmatpush1.bf16.msra.mxu0 0
    %802 = vmatprep.subr.bf16.mxu0 0
    %803 = vmatpush1.bf16.msra.mxu0 0
    %804 = vmatprep.subr.bf16.mxu0 0
    %805 = vmatpush1.bf16.msra.mxu0 0
    %806 = vmatprep.subr.bf16.mxu0 0
    %807 = vmatpush1.bf16.msra.mxu0 0
    %808 = vmatprep.subr.bf16.mxu0 0
    %809 = vmatpush1.bf16.msra.mxu0 0
    %810 = vmatprep.subr.bf16.mxu0 0
    %811 = vmatpush1.bf16.msra.mxu0 0
    %812 = vmatprep.subr.bf16.mxu0 0
    %813 = vmatpush1.bf16.msra.mxu0 0
    %814 = vmatprep.subr.bf16.mxu0 0
    %815 = vmatpush1.bf16.msra.mxu0 0
    %816 = vmatprep.subr.bf16.mxu0 0
    %817 = vmatpush1.bf16.msra.mxu0 0
    %818 = vmatprep.mubr.bf16.mxu0 0
    %819 = vmatmul.mubr.bf16.gmra.mrb[0].mxu0 %v130
    %v820 = vpop.f32.mrb[0].mxu0
    %v821 = vadd.f32 0.0, %v820
    %v822 = vpop.f32.mrb[0].mxu0
    %v823 = vadd.f32 0.0, %v822
    %v824 = vpop.f32.mrb[0].mxu0
    %v825 = vadd.f32 0.0, %v824
    %v826 = vpop.f32.mrb[0].mxu0
    %v827 = vadd.f32 0.0, %v826
    %828 = vdwg.mxu0
    %v830 = vsel %vm128, %v684, 0
    %832 = vmatprep.subr.bf16.mxu0 %v243
    %833 = vmatpush1.bf16.msra.mxu0 %v242
    %834 = vmatprep.subr.bf16.mxu0 %v247
    %835 = vmatpush1.bf16.msra.mxu0 %v246
    %836 = vmatprep.subr.bf16.mxu0 0
    %837 = vmatpush1.bf16.msra.mxu0 0
    %838 = vmatprep.subr.bf16.mxu0 0
    %839 = vmatpush1.bf16.msra.mxu0 0
    %840 = vmatprep.subr.bf16.mxu0 0
    %841 = vmatpush1.bf16.msra.mxu0 0
    %842 = vmatprep.subr.bf16.mxu0 0
    %843 = vmatpush1.bf16.msra.mxu0 0
    %844 = vmatprep.subr.bf16.mxu0 0
    %845 = vmatpush1.bf16.msra.mxu0 0
    %846 = vmatprep.subr.bf16.mxu0 0
    %847 = vmatpush1.bf16.msra.mxu0 0
    %848 = vmatprep.subr.bf16.mxu0 0
    %849 = vmatpush1.bf16.msra.mxu0 0
    %850 = vmatprep.subr.bf16.mxu0 0
    %851 = vmatpush1.bf16.msra.mxu0 0
    %852 = vmatprep.subr.bf16.mxu0 0
    %853 = vmatpush1.bf16.msra.mxu0 0
    %854 = vmatprep.subr.bf16.mxu0 0
    %855 = vmatpush1.bf16.msra.mxu0 0
    %856 = vmatprep.subr.bf16.mxu0 0
    %857 = vmatpush1.bf16.msra.mxu0 0
    %858 = vmatprep.subr.bf16.mxu0 0
    %859 = vmatpush1.bf16.msra.mxu0 0
    %860 = vmatprep.subr.bf16.mxu0 0
    %861 = vmatpush1.bf16.msra.mxu0 0
    %862 = vmatprep.subr.bf16.mxu0 0
    %863 = vmatpush1.bf16.msra.mxu0 0
    %864 = vmatprep.mubr.bf16.mxu0 0
    %865 = vmatmul.mubr.bf16.gmra.mrb[0].mxu0 %v830
    %v866 = vpop.f32.mrb[0].mxu0
    %v867 = vadd.f32 0.0, %v866
    %v868 = vpop.f32.mrb[0].mxu0
    %v869 = vadd.f32 0.0, %v868
    %v870 = vpop.f32.mrb[0].mxu0
    %v871 = vadd.f32 0.0, %v870
    %v872 = vpop.f32.mrb[0].mxu0
    %v873 = vadd.f32 0.0, %v872
    %874 = vdwg.mxu0
    %875 = vmatprep.subr.bf16.mxu0 %v245
    %876 = vmatpush1.bf16.msra.mxu0 %v244
    %877 = vmatprep.subr.bf16.mxu0 %v249
    %878 = vmatpush1.bf16.msra.mxu0 %v248
    %879 = vmatprep.subr.bf16.mxu0 0
    %880 = vmatpush1.bf16.msra.mxu0 0
    %881 = vmatprep.subr.bf16.mxu0 0
    %882 = vmatpush1.bf16.msra.mxu0 0
    %883 = vmatprep.subr.bf16.mxu0 0
    %884 = vmatpush1.bf16.msra.mxu0 0
    %885 = vmatprep.subr.bf16.mxu0 0
    %886 = vmatpush1.bf16.msra.mxu0 0
    %887 = vmatprep.subr.bf16.mxu0 0
    %888 = vmatpush1.bf16.msra.mxu0 0
    %889 = vmatprep.subr.bf16.mxu0 0
    %890 = vmatpush1.bf16.msra.mxu0 0
    %891 = vmatprep.subr.bf16.mxu0 0
    %892 = vmatpush1.bf16.msra.mxu0 0
    %893 = vmatprep.subr.bf16.mxu0 0
    %894 = vmatpush1.bf16.msra.mxu0 0
    %895 = vmatprep.subr.bf16.mxu0 0
    %896 = vmatpush1.bf16.msra.mxu0 0
    %897 = vmatprep.subr.bf16.mxu0 0
    %898 = vmatpush1.bf16.msra.mxu0 0
    %899 = vmatprep.subr.bf16.mxu0 0
    %900 = vmatpush1.bf16.msra.mxu0 0
    %901 = vmatprep.subr.bf16.mxu0 0
    %902 = vmatpush1.bf16.msra.mxu0 0
    %903 = vmatprep.subr.bf16.mxu0 0
    %904 = vmatpush1.bf16.msra.mxu0 0
    %905 = vmatprep.subr.bf16.mxu0 0
    %906 = vmatpush1.bf16.msra.mxu0 0
    %907 = vmatprep.mubr.bf16.mxu0 0
    %908 = vmatmul.mubr.bf16.gmra.mrb[0].mxu0 %v830
    %v909 = vpop.f32.mrb[0].mxu0
    %v910 = vadd.f32 0.0, %v909
    %v911 = vpop.f32.mrb[0].mxu0
    %v912 = vadd.f32 0.0, %v911
    %v913 = vpop.f32.mrb[0].mxu0
    %v914 = vadd.f32 0.0, %v913
    %v915 = vpop.f32.mrb[0].mxu0
    %v916 = vadd.f32 0.0, %v915
    %917 = vdwg.mxu0
    %v918 = vmul.f32 %v778, %v867
    %v919 = vmul.f32 %v780, %v869
    %v920 = vmul.f32 %v821, %v910
    %v921 = vmul.f32 %v823, %v912
    %v922 = vmul.f32 %v782, %v871
    %v923 = vmul.f32 %v784, %v873
    %v924 = vmul.f32 %v825, %v914
    %v925 = vmul.f32 %v827, %v916
    %v926 = vadd.f32 %v918, %v920
    %v927 = vadd.f32 %v919, %v921
    %v928 = vadd.f32 %v922, %v924
    %v929 = vadd.f32 %v923, %v925
    %v930 = vadd.f32 %v926, %v927
    %v931 = vadd.f32 %v928, %v929
    %934 = vrot.lane.b32.xlu0 %v930, 64
    %v935 = vpop.permute.xlu0 %934
    %936 = vrot.lane.b32.xlu0 %v931, 64
    %v937 = vpop.permute.xlu0 %936
    %v940 = vadd.f32 %v930, %v935
    %v941 = vadd.f32 %v931, %v937
    %944 = vrot.lane.b32.xlu0 %v940, 96
    %v945 = vpop.permute.xlu0 %944
    %946 = vrot.lane.b32.xlu0 %v941, 96
    %v947 = vpop.permute.xlu0 %946
    %v950 = vadd.f32 %v940, %v945
    %v951 = vadd.f32 %v941, %v947
    %v952 = vadd.f32 %v693, %v950
    %v953 = vadd.f32 %v694, %v951
    %v954 = vld [vmem:[#allocation5 + $0x30] sm:$0xff]
    %v955 = vld [vmem:[#allocation5 + $0x38] sm:$0xff]
    %v956 = vld [vmem:[#allocation5 + $0x70] sm:$0xff]
    %v957 = vld [vmem:[#allocation5 + $0x78] sm:$0xff]
    %v958 = vld [vmem:[#allocation5 + $0xb0] sm:$0xff]
    %v959 = vld [vmem:[#allocation5 + $0xb8] sm:$0xff]
    %v960 = vld [vmem:[#allocation5 + $0xf0] sm:$0xff]
    %v961 = vld [vmem:[#allocation5 + $0xf8] sm:$0xff]
    %v970 = vunpack.c.l.b16 %v954
    %v971 = vunpack.c.h.b16 %v954
    %v972 = vunpack.c.l.b16 %v955
    %v973 = vunpack.c.h.b16 %v955
    %v974 = vunpack.c.l.b16 %v956
    %v975 = vunpack.c.h.b16 %v956
    %v976 = vunpack.c.l.b16 %v957
    %v977 = vunpack.c.h.b16 %v957
    %v978 = vunpack.c.l.b16 %v958
    %v979 = vunpack.c.h.b16 %v958
    %v980 = vunpack.c.l.b16 %v959
    %v981 = vunpack.c.h.b16 %v959
    %v982 = vunpack.c.l.b16 %v960
    %v983 = vunpack.c.h.b16 %v960
    %v984 = vunpack.c.l.b16 %v961
    %v985 = vunpack.c.h.b16 %v961
    %v986 = vpack.c.b16 %v974, %v970
    %v987 = vpack.c.b16 %v975, %v971
    %v988 = vpack.c.b16 %v976, %v972
    %v989 = vpack.c.b16 %v977, %v973
    %v990 = vpack.c.b16 %v982, %v978
    %v991 = vpack.c.b16 %v983, %v979
    %v992 = vpack.c.b16 %v984, %v980
    %v993 = vpack.c.b16 %v985, %v981
    %1002 = vmatprep.subr.bf16.mxu0 %v987
    %1003 = vmatpush1.bf16.msra.mxu0 %v986
    %1004 = vmatprep.subr.bf16.mxu0 %v991
    %1005 = vmatpush1.bf16.msra.mxu0 %v990
    %1006 = vmatprep.subr.bf16.mxu0 0
    %1007 = vmatpush1.bf16.msra.mxu0 0
    %1008 = vmatprep.subr.bf16.mxu0 0
    %1009 = vmatpush1.bf16.msra.mxu0 0
    %1010 = vmatprep.subr.bf16.mxu0 0
    %1011 = vmatpush1.bf16.msra.mxu0 0
    %1012 = vmatprep.subr.bf16.mxu0 0
    %1013 = vmatpush1.bf16.msra.mxu0 0
    %1014 = vmatprep.subr.bf16.mxu0 0
    %1015 = vmatpush1.bf16.msra.mxu0 0
    %1016 = vmatprep.subr.bf16.mxu0 0
    %1017 = vmatpush1.bf16.msra.mxu0 0
    %1018 = vmatprep.subr.bf16.mxu0 0
    %1019 = vmatpush1.bf16.msra.mxu0 0
    %1020 = vmatprep.subr.bf16.mxu0 0
    %1021 = vmatpush1.bf16.msra.mxu0 0
    %1022 = vmatprep.subr.bf16.mxu0 0
    %1023 = vmatpush1.bf16.msra.mxu0 0
    %1024 = vmatprep.subr.bf16.mxu0 0
    %1025 = vmatpush1.bf16.msra.mxu0 0
    %1026 = vmatprep.subr.bf16.mxu0 0
    %1027 = vmatpush1.bf16.msra.mxu0 0
    %1028 = vmatprep.subr.bf16.mxu0 0
    %1029 = vmatpush1.bf16.msra.mxu0 0
    %1030 = vmatprep.subr.bf16.mxu0 0
    %1031 = vmatpush1.bf16.msra.mxu0 0
    %1032 = vmatprep.subr.bf16.mxu0 0
    %1033 = vmatpush1.bf16.msra.mxu0 0
    %1034 = vmatprep.mubr.bf16.mxu0 0
    %1035 = vmatmul.mubr.bf16.gmra.mrb[0].mxu0 %v130
    %v1036 = vpop.f32.mrb[0].mxu0
    %v1037 = vadd.f32 0.0, %v1036
    %v1038 = vpop.f32.mrb[0].mxu0
    %v1039 = vadd.f32 0.0, %v1038
    %v1040 = vpop.f32.mrb[0].mxu0
    %v1041 = vadd.f32 0.0, %v1040
    %v1042 = vpop.f32.mrb[0].mxu0
    %v1043 = vadd.f32 0.0, %v1042
    %1044 = vdwg.mxu0
    %1045 = vmatprep.subr.bf16.mxu0 %v989
    %1046 = vmatpush1.bf16.msra.mxu0 %v988
    %1047 = vmatprep.subr.bf16.mxu0 %v993
    %1048 = vmatpush1.bf16.msra.mxu0 %v992
    %1049 = vmatprep.subr.bf16.mxu0 0
    %1050 = vmatpush1.bf16.msra.mxu0 0
    %1051 = vmatprep.subr.bf16.mxu0 0
    %1052 = vmatpush1.bf16.msra.mxu0 0
    %1053 = vmatprep.subr.bf16.mxu0 0
    %1054 = vmatpush1.bf16.msra.mxu0 0
    %1055 = vmatprep.subr.bf16.mxu0 0
    %1056 = vmatpush1.bf16.msra.mxu0 0
    %1057 = vmatprep.subr.bf16.mxu0 0
    %1058 = vmatpush1.bf16.msra.mxu0 0
    %1059 = vmatprep.subr.bf16.mxu0 0
    %1060 = vmatpush1.bf16.msra.mxu0 0
    %1061 = vmatprep.subr.bf16.mxu0 0
    %1062 = vmatpush1.bf16.msra.mxu0 0
    %1063 = vmatprep.subr.bf16.mxu0 0
    %1064 = vmatpush1.bf16.msra.mxu0 0
    %1065 = vmatprep.subr.bf16.mxu0 0
    %1066 = vmatpush1.bf16.msra.mxu0 0
    %1067 = vmatprep.subr.bf16.mxu0 0
    %1068 = vmatpush1.bf16.msra.mxu0 0
    %1069 = vmatprep.subr.bf16.mxu0 0
    %1070 = vmatpush1.bf16.msra.mxu0 0
    %1071 = vmatprep.subr.bf16.mxu0 0
    %1072 = vmatpush1.bf16.msra.mxu0 0
    %1073 = vmatprep.subr.bf16.mxu0 0
    %1074 = vmatpush1.bf16.msra.mxu0 0
    %1075 = vmatprep.subr.bf16.mxu0 0
    %1076 = vmatpush1.bf16.msra.mxu0 0
    %1077 = vmatprep.mubr.bf16.mxu0 0
    %1078 = vmatmul.mubr.bf16.gmra.mrb[0].mxu0 %v130
    %v1079 = vpop.f32.mrb[0].mxu0
    %v1080 = vadd.f32 0.0, %v1079
    %v1081 = vpop.f32.mrb[0].mxu0
    %v1082 = vadd.f32 0.0, %v1081
    %v1083 = vpop.f32.mrb[0].mxu0
    %v1084 = vadd.f32 0.0, %v1083
    %v1085 = vpop.f32.mrb[0].mxu0
    %v1086 = vadd.f32 0.0, %v1085
    %1087 = vdwg.mxu0
    %1088 = vmatprep.subr.bf16.mxu0 %v547
    %1089 = vmatpush1.bf16.msra.mxu0 %v546
    %1090 = vmatprep.subr.bf16.mxu0 %v551
    %1091 = vmatpush1.bf16.msra.mxu0 %v550
    %1092 = vmatprep.subr.bf16.mxu0 0
    %1093 = vmatpush1.bf16.msra.mxu0 0
    %1094 = vmatprep.subr.bf16.mxu0 0
    %1095 = vmatpush1.bf16.msra.mxu0 0
    %1096 = vmatprep.subr.bf16.mxu0 0
    %1097 = vmatpush1.bf16.msra.mxu0 0
    %1098 = vmatprep.subr.bf16.mxu0 0
    %1099 = vmatpush1.bf16.msra.mxu0 0
    %1100 = vmatprep.subr.bf16.mxu0 0
    %1101 = vmatpush1.bf16.msra.mxu0 0
    %1102 = vmatprep.subr.bf16.mxu0 0
    %1103 = vmatpush1.bf16.msra.mxu0 0
    %1104 = vmatprep.subr.bf16.mxu0 0
    %1105 = vmatpush1.bf16.msra.mxu0 0
    %1106 = vmatprep.subr.bf16.mxu0 0
    %1107 = vmatpush1.bf16.msra.mxu0 0
    %1108 = vmatprep.subr.bf16.mxu0 0
    %1109 = vmatpush1.bf16.msra.mxu0 0
    %1110 = vmatprep.subr.bf16.mxu0 0
    %1111 = vmatpush1.bf16.msra.mxu0 0
    %1112 = vmatprep.subr.bf16.mxu0 0
    %1113 = vmatpush1.bf16.msra.mxu0 0
    %1114 = vmatprep.subr.bf16.mxu0 0
    %1115 = vmatpush1.bf16.msra.mxu0 0
    %1116 = vmatprep.subr.bf16.mxu0 0
    %1117 = vmatpush1.bf16.msra.mxu0 0
    %1118 = vmatprep.subr.bf16.mxu0 0
    %1119 = vmatpush1.bf16.msra.mxu0 0
    %1120 = vmatprep.mubr.bf16.mxu0 0
    %1121 = vmatmul.mubr.bf16.gmra.mrb[0].mxu0 %v830
    %v1122 = vpop.f32.mrb[0].mxu0
    %v1123 = vadd.f32 0.0, %v1122
    %v1124 = vpop.f32.mrb[0].mxu0
    %v1125 = vadd.f32 0.0, %v1124
    %v1126 = vpop.f32.mrb[0].mxu0
    %v1127 = vadd.f32 0.0, %v1126
    %v1128 = vpop.f32.mrb[0].mxu0
    %v1129 = vadd.f32 0.0, %v1128
    %1130 = vdwg.mxu0
    %1131 = vmatprep.subr.bf16.mxu0 %v549
    %1132 = vmatpush1.bf16.msra.mxu0 %v548
    %1133 = vmatprep.subr.bf16.mxu0 %v553
    %1134 = vmatpush1.bf16.msra.mxu0 %v552
    %1135 = vmatprep.subr.bf16.mxu0 0
    %1136 = vmatpush1.bf16.msra.mxu0 0
    %1137 = vmatprep.subr.bf16.mxu0 0
    %1138 = vmatpush1.bf16.msra.mxu0 0
    %1139 = vmatprep.subr.bf16.mxu0 0
    %1140 = vmatpush1.bf16.msra.mxu0 0
    %1141 = vmatprep.subr.bf16.mxu0 0
    %1142 = vmatpush1.bf16.msra.mxu0 0
    %1143 = vmatprep.subr.bf16.mxu0 0
    %1144 = vmatpush1.bf16.msra.mxu0 0
    %1145 = vmatprep.subr.bf16.mxu0 0
    %1146 = vmatpush1.bf16.msra.mxu0 0
    %1147 = vmatprep.subr.bf16.mxu0 0
    %1148 = vmatpush1.bf16.msra.mxu0 0
    %1149 = vmatprep.subr.bf16.mxu0 0
    %1150 = vmatpush1.bf16.msra.mxu0 0
    %1151 = vmatprep.subr.bf16.mxu0 0
    %1152 = vmatpush1.bf16.msra.mxu0 0
    %1153 = vmatprep.subr.bf16.mxu0 0
    %1154 = vmatpush1.bf16.msra.mxu0 0
    %1155 = vmatprep.subr.bf16.mxu0 0
    %1156 = vmatpush1.bf16.msra.mxu0 0
    %1157 = vmatprep.subr.bf16.mxu0 0
    %1158 = vmatpush1.bf16.msra.mxu0 0
    %1159 = vmatprep.subr.bf16.mxu0 0
    %1160 = vmatpush1.bf16.msra.mxu0 0
    %1161 = vmatprep.subr.bf16.mxu0 0
    %1162 = vmatpush1.bf16.msra.mxu0 0
    %1163 = vmatprep.mubr.bf16.mxu0 0
    %1164 = vmatmul.mubr.bf16.gmra.mrb[0].mxu0 %v830
    %v1165 = vpop.f32.mrb[0].mxu0
    %v1166 = vadd.f32 0.0, %v1165
    %v1167 = vpop.f32.mrb[0].mxu0
    %v1168 = vadd.f32 0.0, %v1167
    %v1169 = vpop.f32.mrb[0].mxu0
    %v1170 = vadd.f32 0.0, %v1169
    %v1171 = vpop.f32.mrb[0].mxu0
    %v1172 = vadd.f32 0.0, %v1171
    %1173 = vdwg.mxu0
    %v1174 = vmul.f32 %v1037, %v1123
    %v1175 = vmul.f32 %v1039, %v1125
    %v1176 = vmul.f32 %v1080, %v1166
    %v1177 = vmul.f32 %v1082, %v1168
    %v1178 = vmul.f32 %v1041, %v1127
    %v1179 = vmul.f32 %v1043, %v1129
    %v1180 = vmul.f32 %v1084, %v1170
    %v1181 = vmul.f32 %v1086, %v1172
    %v1182 = vadd.f32 %v1174, %v1176
    %v1183 = vadd.f32 %v1175, %v1177
    %v1184 = vadd.f32 %v1178, %v1180
    %v1185 = vadd.f32 %v1179, %v1181
    %v1186 = vadd.f32 %v1182, %v1183
    %v1187 = vadd.f32 %v1184, %v1185
    %1190 = vrot.lane.b32.xlu0 %v1186, 64
    %v1191 = vpop.permute.xlu0 %1190
    %1192 = vrot.lane.b32.xlu0 %v1187, 64
    %v1193 = vpop.permute.xlu0 %1192
    %v1196 = vadd.f32 %v1186, %v1191
    %v1197 = vadd.f32 %v1187, %v1193
    %1200 = vrot.lane.b32.xlu0 %v1196, 96
    %v1201 = vpop.permute.xlu0 %1200
    %1202 = vrot.lane.b32.xlu0 %v1197, 96
    %v1203 = vpop.permute.xlu0 %1202
    %v1206 = vadd.f32 %v1196, %v1201
    %v1207 = vadd.f32 %v1197, %v1203
    %v1208 = vadd.f32 %v952, %v1206
    %v1209 = vadd.f32 %v953, %v1207
    %1210 = vst.msk [vmem:[#allocation8] sm:$0xff] %vm128, %v1208
    %1211 = vst.msk [vmem:[#allocation8 + $0x8] sm:$0xff] %vm128, %v1209
    // Predicated region
    $region30: #{bilinear_network_forward.1} parent=1 // pred_check
      _
    $region31: #{bilinear_network_forward.1} parent=1 // pred_check_branch
      %1213 = sbr.rel (0) target = $region33
    $region32: #{bilinear_network_forward.1} parent=1 // pred_region
      %s1215 = ssub.s32 256, 256
      %1216 = vsyncadd [#allocation4], %s1215
      %s1217 = sshll.u32 [#allocation8], 4
      %s1218 = int_to_ptr.vmem [resolvable:$true] %s1217
      %1223 = dma.vmem_to_hbm [thread:$0]  %s1218, 256, %s4, [#allocation4], 128, 128, 8
    $region33: #{bilinear_network_forward.1} parent=1 // pred_fallthru
      _
    // Predicated region
    $region34: #{bilinear_network_forward.1} parent=1 // pred_check
      _
    $region35: #{bilinear_network_forward.1} parent=1 // pred_check_branch
      %1225 = sbr.rel (0) target = $region37
    $region36: #{bilinear_network_forward.1} parent=1 // pred_region
      %1226 = dma.done [#allocation4], 256
    $region37: #{bilinear_network_forward.1} parent=1 // pred_fallthru
      _
    %1227 = vsyncpa [#allocation3], 1
    %1228 = vsyncpa [#allocation6], 1
    %1229 = vsyncpa [#allocation4], 1

</llo_original>
